<compile_context>
chip_gen: v5e
topology: v5e:2x2
jax: 0.10.0
libtpu: 0.0.40
codegen_flags: <defaults>
</compile_context>

<pallas_src>
import jax
import jax.numpy as jnp
from jax.experimental import pallas as pl
from jax.experimental.pallas import tpu as pltpu

B, S, H, NUM_LABELS = 2, 8, 128, 2       # batch, seq, hidden, labels
NPAD = 128                               # classifier padded to a full lane tile
LN_EPS = 1e-5                            # torch.nn.LayerNorm default eps
IGNORE_INDEX = -100                      # torch CrossEntropyLoss default

# Advisory cost hint (CLS-only bytes; dominant flops = classifier matmul).
_COST = pl.CostEstimate(
    flops=2 * B * H * NPAD + 16 * B * H,
    transcendentals=B * NPAD + B,
    bytes_accessed=4 * B * H * 2 + (2 * H + H * NPAD + NPAD + B * NPAD) * 4,
)


def _cls_logits(cls_ref, gates_ref, gamma_ref, beta_ref, w_ref, b_ref):
    """Gated sum of the last-4 CLS vectors -> LayerNorm -> Linear (padded)."""
    cls_hs = cls_ref[...].astype(jnp.float32)          # (4,B,H): CLS rows only
    # Raw (un-normalized) gates, exactly as in the PyTorch module.
    ws = (gates_ref[0] * cls_hs[0] + gates_ref[1] * cls_hs[1]
          + gates_ref[2] * cls_hs[2] + gates_ref[3] * cls_hs[3])       # (B,H)

    # LayerNorm over the hidden dim (biased variance, like torch.nn.LayerNorm).
    # LN is per-position, so LN-on-CLS-only == full-LN-then-slice.
    mean = jnp.mean(ws, axis=-1, keepdims=True)
    cen = ws - mean
    var = jnp.mean(cen * cen, axis=-1, keepdims=True)
    normed = cen * jax.lax.rsqrt(var + LN_EPS)
    normed = normed * gamma_ref[...] + beta_ref[...]                   # gamma/beta: (1,H)

    # Lane-dense classifier: weights padded to (H,128) -> full-tile MXU result.
    return jnp.dot(normed, w_ref[...], preferred_element_type=jnp.float32) + b_ref[...]


def _logits_kernel(cls_ref, gates_ref, gamma_ref, beta_ref, w_ref, b_ref, logits_ref):
    logits_ref[...] = _cls_logits(cls_ref, gates_ref, gamma_ref, beta_ref, w_ref, b_ref)


def _logits_loss_kernel(cls_ref, gates_ref, gamma_ref, beta_ref, w_ref, b_ref,
                        labels_ref, logits_ref, loss_ref):
    logits = _cls_logits(cls_ref, gates_ref, gamma_ref, beta_ref, w_ref, b_ref)
    logits_ref[...] = logits                                           # (B,NPAD)

    # Fused CrossEntropyLoss (mean over non-ignored labels) on the first
    # NUM_LABELS lanes; padded lanes are masked out of the log-sum-exp.
    labels = labels_ref[...]                                           # (B,1) int32
    lane = jax.lax.broadcasted_iota(jnp.int32, logits.shape, 1)        # (B,NPAD)
    class_valid = lane < NUM_LABELS
    masked = jnp.where(class_valid, logits, -jnp.inf)
    m = jnp.max(masked, axis=-1, keepdims=True)                        # (B,1)
    ex = jnp.where(class_valid, jnp.exp(logits - m), 0.0)
    lse = m + jnp.log(jnp.sum(ex, axis=-1, keepdims=True))             # (B,1)
    onehot = lane == labels
    picked = jnp.sum(jnp.where(onehot, logits, 0.0), axis=-1, keepdims=True)

    valid = (labels != IGNORE_INDEX).astype(jnp.float32)               # (B,1)
    per_ex = (lse - picked) * valid
    cnt = jnp.sum(valid)
    loss_ref[0, 0] = jnp.sum(per_ex) / jnp.maximum(cnt, 1.0)


def pack_whla_params(ln_gamma, ln_beta, fc_w, fc_b):
    """One-time parameter packing (do NOT call per forward)."""
    return {
        "gamma2": ln_gamma.reshape(1, H).astype(jnp.float32),
        "beta2": ln_beta.reshape(1, H).astype(jnp.float32),
        "w_pad": jnp.pad(fc_w.astype(jnp.float32), ((0, 0), (0, NPAD - NUM_LABELS))),
        "b_pad": jnp.pad(fc_b.astype(jnp.float32), (0, NPAD - NUM_LABELS)).reshape(1, NPAD),
    }


def whla_bert_head(hidden_states_last4, gates, packed, labels=None):
    """hidden_states_last4: stacked (4,B,S,H) hidden states (L9..L12) OR a
    pre-extracted (4,B,H) stack of CLS vectors; bf16 or f32."""
    if hidden_states_last4.ndim == 4:
        # CLS-only: never move the full (4,B,S,H) slab into VMEM.
        cls_last4 = hidden_states_last4[:, :, 0, :]                    # (4,B,H)
    else:
        cls_last4 = hidden_states_last4

    vmem = pl.BlockSpec(memory_space=pltpu.MemorySpace.VMEM)
    smem = pl.BlockSpec(memory_space=pltpu.MemorySpace.SMEM)

    if labels is None:
        logits_pad = pl.pallas_call(
            _logits_kernel,
            out_shape=jax.ShapeDtypeStruct((B, NPAD), jnp.float32),
            in_specs=[vmem, smem, vmem, vmem, vmem, vmem],
            out_specs=vmem,
            cost_estimate=_COST,
        )(cls_last4, gates, packed["gamma2"], packed["beta2"],
          packed["w_pad"], packed["b_pad"])
        return {"logits": logits_pad[:, :NUM_LABELS]}

    labels2 = labels.astype(jnp.int32).reshape(B, 1)
    logits_pad, loss = pl.pallas_call(
        _logits_loss_kernel,
        out_shape=(jax.ShapeDtypeStruct((B, NPAD), jnp.float32),
                   jax.ShapeDtypeStruct((1, 1), jnp.float32)),
        in_specs=[vmem, smem, vmem, vmem, vmem, vmem, vmem],
        out_specs=(vmem, smem),
        cost_estimate=_COST,
    )(cls_last4, gates, packed["gamma2"], packed["beta2"],
      packed["w_pad"], packed["b_pad"], labels2)
    return {"loss": loss[0, 0], "logits": logits_pad[:, :NUM_LABELS]}


def _reference(hs_last4, gates, ln_gamma, ln_beta, fc_w, fc_b, labels):
    """Plain-JAX reference of the PyTorch forward (for a sanity check)."""
    hs = hs_last4.astype(jnp.float32)
    ws = (gates[0] * hs[0] + gates[1] * hs[1] + gates[2] * hs[2] + gates[3] * hs[3])
    mean = jnp.mean(ws, axis=-1, keepdims=True)
    var = jnp.mean((ws - mean) ** 2, axis=-1, keepdims=True)
    normed = (ws - mean) / jnp.sqrt(var + LN_EPS) * ln_gamma + ln_beta
    cls = normed[:, 0, :]
    logits = cls @ fc_w + fc_b
    logz = jax.nn.log_softmax(logits, axis=-1)
    safe = jnp.clip(labels, 0, NUM_LABELS - 1)
    nll = -jnp.take_along_axis(logz, safe[:, None], axis=-1)[:, 0]
    valid = (labels != IGNORE_INDEX).astype(jnp.float32)
    loss = jnp.sum(nll * valid) / jnp.maximum(jnp.sum(valid), 1.0)
    return logits, loss


if __name__ == "__main__":
    key = jax.random.PRNGKey(0)
    k = jax.random.split(key, 3)

    # Synthetic stand-ins for the BERT backbone's last-4 hidden states (L9..L12),
    # emitted contiguously as (4,B,S,H) in bf16 (backbone-native output dtype).
    hs_last4 = jax.random.normal(k[0], (4, B, S, H), jnp.float32).astype(jnp.bfloat16)

    # Module parameters, deterministic per the __init__:
    gates = jnp.ones((4,), jnp.float32)          # nn.Parameter(torch.ones(4))
    ln_gamma = jnp.ones((H,), jnp.float32)       # nn.LayerNorm default weight
    ln_beta = jnp.zeros((H,), jnp.float32)       # nn.LayerNorm default bias
    bound = float(1.0 / (H ** 0.5))              # nn.Linear default init range
    fc_w = jax.random.uniform(k[1], (H, NUM_LABELS), jnp.float32, -bound, bound)
    fc_b = jax.random.uniform(k[2], (NUM_LABELS,), jnp.float32, -bound, bound)

    labels = jnp.array([0, 1], dtype=jnp.int32)

    packed = pack_whla_params(ln_gamma, ln_beta, fc_w, fc_b)   # once, off the hot path

    out = whla_bert_head(hs_last4, gates, packed, labels=labels)
    jax.block_until_ready(out["logits"])
    jax.block_until_ready(out["loss"])

    out_nolabel = whla_bert_head(hs_last4, gates, packed)
    jax.block_until_ready(out_nolabel["logits"])

    # Also exercise the preferred interface: backbone hands over CLS rows only.
    cls_only = hs_last4[:, :, 0, :]
    out_cls = whla_bert_head(cls_only, gates, packed, labels=labels)
    jax.block_until_ready(out_cls["logits"])

    # Sanity check against a plain-JAX reference of the same forward.
    ref_logits, ref_loss = _reference(hs_last4, gates, ln_gamma, ln_beta, fc_w, fc_b, labels)
    assert jnp.allclose(out["logits"], ref_logits, atol=1e-3, rtol=1e-3)
    assert jnp.allclose(out["loss"], ref_loss, atol=1e-3, rtol=1e-3)
    assert jnp.allclose(out_nolabel["logits"], ref_logits, atol=1e-3, rtol=1e-3)
    assert jnp.allclose(out_cls["logits"], ref_logits, atol=1e-3, rtol=1e-3)
    assert jnp.allclose(out_cls["loss"], ref_loss, atol=1e-3, rtol=1e-3)

    print("KERNEL_OK")
</pallas_src>

<mosaic_0001>
module attributes {stable_mosaic.version = 11 : i64} {
  func.func @_logits_loss_kernel(%arg0: memref<4x2x128xbf16, #tpu.memory_space<vmem>>, %arg1: memref<4xf32, #tpu.memory_space<smem>>, %arg2: memref<1x128xf32, #tpu.memory_space<vmem>>, %arg3: memref<1x128xf32, #tpu.memory_space<vmem>>, %arg4: memref<128x128xf32, #tpu.memory_space<vmem>>, %arg5: memref<1x128xf32, #tpu.memory_space<vmem>>, %arg6: memref<2x1xi32, #tpu.memory_space<vmem>>, %arg7: memref<2x128xf32, #tpu.memory_space<vmem>>, %arg8: memref<1x1xf32, #tpu.memory_space<smem>>) attributes {dimension_semantics = [], scalar_prefetch = 0 : i64, scratch_operands = 0 : i64, tpu.core_type = #tpu.core_type<tc>} {
    %c0 = arith.constant 0 : index
    %c0_0 = arith.constant 0 : index
    %c0_1 = arith.constant 0 : index
    %0 = vector.load %arg0[%c0, %c0_0, %c0_1] : memref<4x2x128xbf16, #tpu.memory_space<vmem>>, vector<4x2x128xbf16>
    %1 = arith.extf %0 : vector<4x2x128xbf16> to vector<4x2x128xf32>
    %c0_2 = arith.constant 0 : index
    %2 = memref.load %arg1[%c0_2] : memref<4xf32, #tpu.memory_space<smem>>
    %3 = vector.extract_strided_slice %1 {offsets = [0, 0, 0], sizes = [1, 2, 128], strides = [1, 1, 1]} : vector<4x2x128xf32> to vector<1x2x128xf32>
    %4 = vector.shape_cast %3 : vector<1x2x128xf32> to vector<2x128xf32>
    %5 = vector.broadcast %2 : f32 to vector<2x128xf32>
    %6 = arith.mulf %5, %4 : vector<2x128xf32>
    %c1 = arith.constant 1 : index
    %7 = memref.load %arg1[%c1] : memref<4xf32, #tpu.memory_space<smem>>
    %8 = vector.extract_strided_slice %1 {offsets = [1, 0, 0], sizes = [1, 2, 128], strides = [1, 1, 1]} : vector<4x2x128xf32> to vector<1x2x128xf32>
    %9 = vector.shape_cast %8 : vector<1x2x128xf32> to vector<2x128xf32>
    %10 = vector.broadcast %7 : f32 to vector<2x128xf32>
    %11 = arith.mulf %10, %9 : vector<2x128xf32>
    %12 = arith.addf %6, %11 : vector<2x128xf32>
    %c2 = arith.constant 2 : index
    %13 = memref.load %arg1[%c2] : memref<4xf32, #tpu.memory_space<smem>>
    %14 = vector.extract_strided_slice %1 {offsets = [2, 0, 0], sizes = [1, 2, 128], strides = [1, 1, 1]} : vector<4x2x128xf32> to vector<1x2x128xf32>
    %15 = vector.shape_cast %14 : vector<1x2x128xf32> to vector<2x128xf32>
    %16 = vector.broadcast %13 : f32 to vector<2x128xf32>
    %17 = arith.mulf %16, %15 : vector<2x128xf32>
    %18 = arith.addf %12, %17 : vector<2x128xf32>
    %c3 = arith.constant 3 : index
    %19 = memref.load %arg1[%c3] : memref<4xf32, #tpu.memory_space<smem>>
    %20 = vector.extract_strided_slice %1 {offsets = [3, 0, 0], sizes = [1, 2, 128], strides = [1, 1, 1]} : vector<4x2x128xf32> to vector<1x2x128xf32>
    %21 = vector.shape_cast %20 : vector<1x2x128xf32> to vector<2x128xf32>
    %22 = vector.broadcast %19 : f32 to vector<2x128xf32>
    %23 = arith.mulf %22, %21 : vector<2x128xf32>
    %24 = arith.addf %18, %23 : vector<2x128xf32>
    %cst = arith.constant dense<0.000000e+00> : vector<2xf32>
    %25 = vector.multi_reduction <add>, %24, %cst [1] : vector<2x128xf32> to vector<2xf32>
    %26 = vector.shape_cast %25 : vector<2xf32> to vector<2x1xf32>
    %cst_3 = arith.constant 1.280000e+02 : f32
    %27 = vector.broadcast %cst_3 : f32 to vector<2x1xf32>
    %28 = arith.divf %26, %27 : vector<2x1xf32>
    %29 = vector.broadcast %28 : vector<2x1xf32> to vector<2x128xf32>
    %30 = arith.subf %24, %29 : vector<2x128xf32>
    %31 = arith.mulf %30, %30 : vector<2x128xf32>
    %cst_4 = arith.constant dense<0.000000e+00> : vector<2xf32>
    %32 = vector.multi_reduction <add>, %31, %cst_4 [1] : vector<2x128xf32> to vector<2xf32>
    %33 = vector.shape_cast %32 : vector<2xf32> to vector<2x1xf32>
    %cst_5 = arith.constant 1.280000e+02 : f32
    %34 = vector.broadcast %cst_5 : f32 to vector<2x1xf32>
    %35 = arith.divf %33, %34 : vector<2x1xf32>
    %cst_6 = arith.constant 9.99999974E-6 : f32
    %36 = vector.broadcast %cst_6 : f32 to vector<2x1xf32>
    %37 = arith.addf %35, %36 : vector<2x1xf32>
    %38 = math.rsqrt %37 : vector<2x1xf32>
    %39 = vector.broadcast %38 : vector<2x1xf32> to vector<2x128xf32>
    %40 = arith.mulf %30, %39 : vector<2x128xf32>
    %c0_7 = arith.constant 0 : index
    %c0_8 = arith.constant 0 : index
    %41 = vector.load %arg2[%c0_7, %c0_8] : memref<1x128xf32, #tpu.memory_space<vmem>>, vector<1x128xf32>
    %42 = vector.broadcast %41 : vector<1x128xf32> to vector<2x128xf32>
    %43 = arith.mulf %40, %42 : vector<2x128xf32>
    %c0_9 = arith.constant 0 : index
    %c0_10 = arith.constant 0 : index
    %44 = vector.load %arg3[%c0_9, %c0_10] : memref<1x128xf32, #tpu.memory_space<vmem>>, vector<1x128xf32>
    %45 = vector.broadcast %44 : vector<1x128xf32> to vector<2x128xf32>
    %46 = arith.addf %43, %45 : vector<2x128xf32>
    %c0_11 = arith.constant 0 : index
    %c0_12 = arith.constant 0 : index
    %47 = vector.load %arg4[%c0_11, %c0_12] : memref<128x128xf32, #tpu.memory_space<vmem>>, vector<128x128xf32>
    %cst_13 = arith.constant dense<0.000000e+00> : vector<2x128xf32>
    %48 = tpu.matmul %46, %47, %cst_13 {dimension_numbers = #tpu.dot_dimension_numbers<[1], [0], [0], [1], [0, 0, 1, 1], [], []>} : vector<2x128xf32>, vector<128x128xf32>, vector<2x128xf32> -> vector<2x128xf32>
    %c0_14 = arith.constant 0 : index
    %c0_15 = arith.constant 0 : index
    %49 = vector.load %arg5[%c0_14, %c0_15] : memref<1x128xf32, #tpu.memory_space<vmem>>, vector<1x128xf32>
    %50 = vector.broadcast %49 : vector<1x128xf32> to vector<2x128xf32>
    %51 = arith.addf %48, %50 : vector<2x128xf32>
    %c0_16 = arith.constant 0 : index
    %c0_17 = arith.constant 0 : index
    %52 = vector.load %arg7[%c0_16, %c0_17] : memref<2x128xf32, #tpu.memory_space<vmem>>, vector<2x128xf32>
    tpu.vector_store %arg7[%c0_16, %c0_17], %51 {strides = array<i32>} : memref<2x128xf32, #tpu.memory_space<vmem>>, vector<2x128xf32>,
    %c0_18 = arith.constant 0 : index
    %c0_19 = arith.constant 0 : index
    %53 = vector.load %arg6[%c0_18, %c0_19] : memref<2x1xi32, #tpu.memory_space<vmem>>, vector<2x1xi32>
    %54 = tpu.iota {dimensions = array<i32: 1>} : vector<2x128xi32>
    %c2_i32 = arith.constant 2 : i32
    %55 = vector.broadcast %c2_i32 : i32 to vector<2x128xi32>
    %56 = arith.cmpi slt, %54, %55 : vector<2x128xi32>
    %cst_20 = arith.constant 0xFF800000 : f32
    %57 = vector.broadcast %cst_20 : f32 to vector<2x128xf32>
    %58 = arith.select %56, %51, %57 : vector<2x128xi1>, vector<2x128xf32>
    %cst_21 = arith.constant dense<0xFF800000> : vector<2xf32>
    %59 = vector.multi_reduction <maximumf>, %58, %cst_21 [1] : vector<2x128xf32> to vector<2xf32>
    %60 = vector.shape_cast %59 : vector<2xf32> to vector<2x1xf32>
    %61 = vector.broadcast %60 : vector<2x1xf32> to vector<2x128xf32>
    %62 = arith.subf %51, %61 : vector<2x128xf32>
    %63 = math.exp %62 : vector<2x128xf32>
    %cst_22 = arith.constant 0.000000e+00 : f32
    %64 = vector.broadcast %cst_22 : f32 to vector<2x128xf32>
    %65 = arith.select %56, %63, %64 : vector<2x128xi1>, vector<2x128xf32>
    %cst_23 = arith.constant dense<0.000000e+00> : vector<2xf32>
    %66 = vector.multi_reduction <add>, %65, %cst_23 [1] : vector<2x128xf32> to vector<2xf32>
    %67 = vector.shape_cast %66 : vector<2xf32> to vector<2x1xf32>
    %68 = math.log %67 : vector<2x1xf32>
    %69 = arith.addf %60, %68 : vector<2x1xf32>
    %70 = vector.broadcast %53 : vector<2x1xi32> to vector<2x128xi32>
    %71 = arith.cmpi eq, %54, %70 : vector<2x128xi32>
    %cst_24 = arith.constant 0.000000e+00 : f32
    %72 = vector.broadcast %cst_24 : f32 to vector<2x128xf32>
    %73 = arith.select %71, %51, %72 : vector<2x128xi1>, vector<2x128xf32>
    %cst_25 = arith.constant dense<0.000000e+00> : vector<2xf32>
    %74 = vector.multi_reduction <add>, %73, %cst_25 [1] : vector<2x128xf32> to vector<2xf32>
    %75 = vector.shape_cast %74 : vector<2xf32> to vector<2x1xf32>
    %c-100_i32 = arith.constant -100 : i32
    %76 = vector.broadcast %c-100_i32 : i32 to vector<2x1xi32>
    %77 = arith.cmpi ne, %53, %76 : vector<2x1xi32>
    %78 = arith.extui %77 : vector<2x1xi1> to vector<2x1xi32>
    %79 = arith.sitofp %78 : vector<2x1xi32> to vector<2x1xf32>
    %80 = arith.subf %69, %75 : vector<2x1xf32>
    %81 = arith.mulf %80, %79 : vector<2x1xf32>
    %82 = vector.shape_cast %79 : vector<2x1xf32> to vector<1x2x1xf32>
    %cst_26 = arith.constant dense<0.000000e+00> : vector<1xf32>
    %83 = vector.multi_reduction <add>, %82, %cst_26 [1, 2] : vector<1x2x1xf32> to vector<1xf32>
    %84 = vector.shape_cast %83 : vector<1xf32> to vector<1x1x1xf32>
    %85 = vector.extract %84[0, 0, 0] : f32 from vector<1x1x1xf32>
    %86 = vector.shape_cast %81 : vector<2x1xf32> to vector<1x2x1xf32>
    %cst_27 = arith.constant dense<0.000000e+00> : vector<1xf32>
    %87 = vector.multi_reduction <add>, %86, %cst_27 [1, 2] : vector<1x2x1xf32> to vector<1xf32>
    %88 = vector.shape_cast %87 : vector<1xf32> to vector<1x1x1xf32>
    %89 = vector.extract %88[0, 0, 0] : f32 from vector<1x1x1xf32>
    %cst_28 = arith.constant 1.000000e+00 : f32
    %90 = arith.maximumf %85, %cst_28 : f32
    %91 = arith.divf %89, %90 : f32
    %c0_29 = arith.constant 0 : index
    %c0_30 = arith.constant 0 : index
    %92 = memref.load %arg8[%c0_29, %c0_30] : memref<1x1xf32, #tpu.memory_space<smem>>
    memref.store %91, %arg8[%c0_29, %c0_30] : memref<1x1xf32, #tpu.memory_space<smem>>
    return
  }
}

</mosaic_0001>

<llo_original>
// kernel: tpu_custom_call.1
$region0: #{tpu_custom_call.1}
  #allocation0 [shape = 'u32[]', space=smem, size = 0x4, offset = 0x4, fixed_abs, tag = 'smem constant byte address 0x4 - core index']
  #allocation1 [shape = 'u32[72,128]{1,0:T(1,128)}', space=vmem, size = 0x9000, scoped, tag = 'internal scratch']
  %s0 = inlined_call_operand.hbm [shape: bf16[4,2,128], index: 0, kind: input, shape index: {}]
  %s1 = inlined_call_operand.vmem [shape: f32[4], index: 1, kind: input, shape index: {}]
  %s2 = inlined_call_operand.vmem [shape: f32[1,128], index: 2, kind: input, shape index: {}]
  %s3 = inlined_call_operand.vmem [shape: f32[1,128], index: 3, kind: input, shape index: {}]
  %s4 = inlined_call_operand.hbm [shape: f32[128,128], index: 4, kind: input, shape index: {}]
  %s5 = inlined_call_operand.vmem [shape: f32[1,128], index: 5, kind: input, shape index: {}]
  %s6 = inlined_call_operand.vmem [shape: s32[2,1], index: 6, kind: input, shape index: {}]
  %s7 = inlined_call_operand.hbm [shape: f32[2,128], index: 7, kind: output, shape index: {0}]
  %s8 = inlined_call_operand.hbm [shape: f32[1,1], index: 8, kind: output, shape index: {1}]
  %9 = xla_tuple %s7, %s8
  %s10 = sld [smem:[#allocation0]]
  $region58: #{tpu_custom_call.1} parent=0
    _
  %s12 = ssub.s32 1, %s10
  %s13 = scalar_select 0, %s12, %s10
  $region1: #{tpu_custom_call.1} parent=0
    #allocation2 [shape = 'u8[2048]{0}', space=vmem, size = 0x800, scoped, tag = 'input window, operand 0, single buffered']
    #allocation3 [shape = 's32[1]{0}', space=sflag, size = 0x4, scoped, tag = 'scoped memory for tpu_custom_call.1']
    #allocation4 [shape = 's32[1]{0}', space=sflag, size = 0x4, scoped, tag = 'scoped memory for tpu_custom_call.1']
    #allocation5 [shape = 's32[1]{0}', space=sflag, size = 0x4, scoped, tag = 'scoped memory for tpu_custom_call.1']
    #allocation6 [shape = 's32[1]{0}', space=sflag, size = 0x4, scoped, tag = 'scoped memory for tpu_custom_call.1']
    #allocation7 [shape = 'u8[512]{0}', space=smem, size = 0x200, scoped, tag = 'input window, operand 1, single buffered']
    #allocation8 [shape = 'u8[65536]{0}', space=vmem, size = 0x10000, scoped, tag = 'input window, operand 4, single buffered']
    #allocation9 [shape = 's32[1]{0}', space=sflag, size = 0x4, scoped, tag = 'scoped memory for tpu_custom_call.1']
    #allocation10 [shape = 'u8[1024]{0}', space=vmem, size = 0x400, scoped, tag = 'output window, operand 0, single buffered']
    #allocation11 [shape = 'u8[512]{0}', space=smem, size = 0x200, scoped, tag = 'output window, operand 1, single buffered']
    %14 = vsyncpa [#allocation3], 0
    %15 = vsyncpa [#allocation6], 0
    %16 = vsyncpa [#allocation9], 0
    %17 = vsyncpa [#allocation4], 0
    %18 = vsyncpa [#allocation5], 0
    // Predicated region
    $region2: #{tpu_custom_call.1} parent=1 // pred_check
      _
    $region3: #{tpu_custom_call.1} parent=1 // pred_check_branch
      %20 = sbr.rel (0) target = $region5
    $region4: #{tpu_custom_call.1} parent=1 // pred_region
      %22 = vsyncadd [#allocation3], 0
      %s23 = sshll.u32 %s0, 4
      %s24 = int_to_ptr.hbm [resolvable:$true] %s23
      %s25 = sshll.u32 [#allocation2], 4
      %s26 = int_to_ptr.vmem [resolvable:$true] %s25
      %31 = dma.hbm_to_vmem [thread:$0]  %s24, 64, %s26, [#allocation3], 16, 16, 1
    $region5: #{tpu_custom_call.1} parent=1 // pred_fallthru
      _
    // Predicated region
    $region6: #{tpu_custom_call.1} parent=1 // pred_check
      _
    $region7: #{tpu_custom_call.1} parent=1 // pred_check_branch
      %33 = sbr.rel (0) target = $region9
    $region8: #{tpu_custom_call.1} parent=1 // pred_region
      %35 = vsyncadd [#allocation6], 0
      %s37 = sshll.u32 %s1, 4
      %s38 = int_to_ptr.vmem [resolvable:$true] %s37
      %40 = dma.vmem_to_smem %s38, 16, [#allocation7], [#allocation6]
    $region9: #{tpu_custom_call.1} parent=1 // pred_fallthru
      _
    // Predicated region
    $region10: #{tpu_custom_call.1} parent=1 // pred_check
      _
    $region11: #{tpu_custom_call.1} parent=1 // pred_check_branch
      %42 = sbr.rel (0) target = $region13
    $region12: #{tpu_custom_call.1} parent=1 // pred_region
      _
    $region13: #{tpu_custom_call.1} parent=1 // pred_fallthru
      _
    // Predicated region
    $region14: #{tpu_custom_call.1} parent=1 // pred_check
      _
    $region15: #{tpu_custom_call.1} parent=1 // pred_check_branch
      %44 = sbr.rel (0) target = $region17
    $region16: #{tpu_custom_call.1} parent=1 // pred_region
      _
    $region17: #{tpu_custom_call.1} parent=1 // pred_fallthru
      _
    // Predicated region
    $region18: #{tpu_custom_call.1} parent=1 // pred_check
      _
    $region19: #{tpu_custom_call.1} parent=1 // pred_check_branch
      %46 = sbr.rel (0) target = $region21
    $region20: #{tpu_custom_call.1} parent=1 // pred_region
      %48 = vsyncadd [#allocation9], 0
      %s49 = sshll.u32 %s4, 4
      %s50 = int_to_ptr.hbm [resolvable:$true] %s49
      %s51 = sshll.u32 [#allocation8], 4
      %s52 = int_to_ptr.vmem [resolvable:$true] %s51
      %57 = dma.hbm_to_vmem [thread:$0]  %s50, 2048, %s52, [#allocation9], 128, 128, 8
    $region21: #{tpu_custom_call.1} parent=1 // pred_fallthru
      _
    // Predicated region
    $region22: #{tpu_custom_call.1} parent=1 // pred_check
      _
    $region23: #{tpu_custom_call.1} parent=1 // pred_check_branch
      %59 = sbr.rel (0) target = $region25
    $region24: #{tpu_custom_call.1} parent=1 // pred_region
      _
    $region25: #{tpu_custom_call.1} parent=1 // pred_fallthru
      _
    // Predicated region
    $region26: #{tpu_custom_call.1} parent=1 // pred_check
      _
    $region27: #{tpu_custom_call.1} parent=1 // pred_check_branch
      %61 = sbr.rel (0) target = $region29
    $region28: #{tpu_custom_call.1} parent=1 // pred_region
      _
    $region29: #{tpu_custom_call.1} parent=1 // pred_fallthru
      _
    // Predicated region
    $region30: #{tpu_custom_call.1} parent=1 // pred_check
      _
    $region31: #{tpu_custom_call.1} parent=1 // pred_check_branch
      %63 = sbr.rel (0) target = $region33
    $region32: #{tpu_custom_call.1} parent=1 // pred_region
      %65 = dma.done [#allocation3], 64
    $region33: #{tpu_custom_call.1} parent=1 // pred_fallthru
      _
    // Predicated region
    $region34: #{tpu_custom_call.1} parent=1 // pred_check
      _
    $region35: #{tpu_custom_call.1} parent=1 // pred_check_branch
      %67 = sbr.rel (0) target = $region37
    $region36: #{tpu_custom_call.1} parent=1 // pred_region
      %69 = dma.done [#allocation6], 16
    $region37: #{tpu_custom_call.1} parent=1 // pred_fallthru
      _
    // Predicated region
    $region38: #{tpu_custom_call.1} parent=1 // pred_check
      _
    $region39: #{tpu_custom_call.1} parent=1 // pred_check_branch
      %71 = sbr.rel (0) target = $region41
    $region40: #{tpu_custom_call.1} parent=1 // pred_region
      %73 = dma.done [#allocation9], 2048
    $region41: #{tpu_custom_call.1} parent=1 // pred_fallthru
      _
    %74 = sfence
    %v75 = vld [vmem:[#allocation2] sm:$0x1]
    %v76 = vld [vmem:[#allocation2 + $0x1] sm:$0x1]
    %v77 = vld [vmem:[#allocation2 + $0x2] sm:$0x1]
    %v78 = vld [vmem:[#allocation2 + $0x3] sm:$0x1]
    %v79 = vunpack.c.l.bf16 %v75
    %v80 = vunpack.c.l.bf16 %v76
    %v81 = vunpack.c.l.bf16 %v77
    %v82 = vunpack.c.l.bf16 %v78
    %s83 = sld [smem:[#allocation7]]
    %v84 = vstv %s83
    %v85 = vmul.f32 %v84, %v79
    %s86 = sld [smem:[#allocation7 + $0x1]]
    %v87 = vstv %s86
    %v88 = vmul.f32 %v87, %v80
    %v89 = vadd.f32 %v85, %v88
    %s90 = sld [smem:[#allocation7 + $0x2]]
    %v91 = vstv %s90
    %v92 = vmul.f32 %v91, %v81
    %v93 = vadd.f32 %v89, %v92
    %s94 = sld [smem:[#allocation7 + $0x3]]
    %v95 = vstv %s94
    %v96 = vmul.f32 %v95, %v82
    %v97 = vadd.f32 %v93, %v96
    %vm98 = vcmask 1041408
    %v99 = vsel %vm98, %v97, 0.0
    %100 = vadd.xlane.f32.xlu0 %v99
    %v101 = vpop.xlane.xlu0 %100
    %v102 = vrcp.pop 128.0
    %v103 = vmul.f32 128.0, %v102
    %v104 = vsub.f32 1.0, %v103
    %v105 = vmul.f32 %v102, %v104
    %v106 = vadd.f32 %v102, %v105
    %vm107 = vweird.f32 %v102
    %v108 = vsel %vm107, %v102, %v106
    %v109 = vmul.f32 %v101, %v108
    %v110 = vsub.f32 %v97, %v109
    %v111 = vmul.f32 %v110, %v110
    %v112 = vsel %vm98, %v111, 0.0
    %113 = vadd.xlane.f32.xlu0 %v112
    %v114 = vpop.xlane.xlu0 %113
    %v115 = vmul.f32 %v114, %v108
    %v116 = vadd.f32 %v115, 1e-05
    %v117 = vrsqrt.pop %v116
    %v118 = vmul.f32 %v117, %v116
    %v119 = vmul.f32 %v118, %v117
    %v120 = vmul.f32 0.5, %v119
    %v121 = vsub.f32 1.5, %v120
    %v122 = vmul.f32 %v117, %v121
    %vm123 = vweird.f32 %v116
    %vm124 = vweird.f32 %v117
    %vm125 = vmor %vm123, %vm124
    %v126 = vsel %vm125, %v117, %v122
    %v127 = vmul.f32 %v110, %v126
    %v128 = vld [vmem:[%s2] sm:$0x1]
    %v130 = vperm.slane %v128, 0
    %v132 = vmul.f32 %v127, %v130
    %v133 = vld [vmem:[%s3] sm:$0x1]
    %v135 = vperm.slane %v133, 0
    %v137 = vadd.f32 %v132, %v135
    %v138 = vld [vmem:[#allocation8] sm:$0xff]
    %v139 = vld [vmem:[#allocation8 + $0x8] sm:$0xff]
    %v140 = vld [vmem:[#allocation8 + $0x10] sm:$0xff]
    %v141 = vld [vmem:[#allocation8 + $0x18] sm:$0xff]
    %v142 = vld [vmem:[#allocation8 + $0x20] sm:$0xff]
    %v143 = vld [vmem:[#allocation8 + $0x28] sm:$0xff]
    %v144 = vld [vmem:[#allocation8 + $0x30] sm:$0xff]
    %v145 = vld [vmem:[#allocation8 + $0x38] sm:$0xff]
    %v146 = vld [vmem:[#allocation8 + $0x40] sm:$0xff]
    %v147 = vld [vmem:[#allocation8 + $0x48] sm:$0xff]
    %v148 = vld [vmem:[#allocation8 + $0x50] sm:$0xff]
    %v149 = vld [vmem:[#allocation8 + $0x58] sm:$0xff]
    %v150 = vld [vmem:[#allocation8 + $0x60] sm:$0xff]
    %v151 = vld [vmem:[#allocation8 + $0x68] sm:$0xff]
    %v152 = vld [vmem:[#allocation8 + $0x70] sm:$0xff]
    %v153 = vld [vmem:[#allocation8 + $0x78] sm:$0xff]
    %v154 = vld [vmem:[%s5] sm:$0x1]
    %v156 = vperm.slane %v154, 0
    %158 = vmatpush.msra.mxu0 %v153
    %159 = vmatpush.msra.mxu0 %v152
    %160 = vmatpush.msra.mxu0 %v151
    %161 = vmatpush.msra.mxu0 %v150
    %162 = vmatpush.msra.mxu0 %v149
    %163 = vmatpush.msra.mxu0 %v148
    %164 = vmatpush.msra.mxu0 %v147
    %165 = vmatpush.msra.mxu0 %v146
    %166 = vmatpush.msra.mxu0 %v145
    %167 = vmatpush.msra.mxu0 %v144
    %168 = vmatpush.msra.mxu0 %v143
    %169 = vmatpush.msra.mxu0 %v142
    %170 = vmatpush.msra.mxu0 %v141
    %171 = vmatpush.msra.mxu0 %v140
    %172 = vmatpush.msra.mxu0 %v139
    %173 = vmatpush.msra.mxu0 %v138
    %174 = vmatmul.f32.gmra.mxu0 %v137
    %v175 = vpop.f32.mrf.mxu0
    %v176 = vadd.f32 %v156, %v175
    %177 = vdwg.mxu0
    %178 = vst [vmem:[#allocation10] sm:$0x3] %v176
    %v179 = vld [vmem:[%s6] sm:$0x3]
    %v180 = vlaneseq
    %v181 = vand.u32 %v180, 127
    %vm182 = vcmp.lt.s32.totalorder %v181, 2
    %v183 = vsel %vm182, %v176, -inf
    %v184 = vsel %vm98, %v183, -inf
    %185 = vmax.xlane.f32.xlu0 %v184
    %v186 = vpop.xlane.xlu0 %185
    %v187 = vsub.f32 %v176, %v186
    %v188 = vmul.f32 %v187, 1.442695
    %v189 = vpow.pop %v188
    %v190 = vsel %vm182, %v189, 0.0
    %v191 = vsel %vm98, %v190, 0.0
    %192 = vadd.xlane.f32.xlu0 %v191
    %v193 = vpop.xlane.xlu0 %192
    %v194 = vlog2.pop %v193
    %v195 = vmul.f32 %v194, 0.6931472
    %v196 = vadd.f32 %v186, %v195
    %197 = vset.pattern.permute.xlu0 0
    %198 = vperm.xlu0 %197, %v179
    %v199 = vpop.permute.xlu0 %198
    %vm200 = vcmp.eq.s32.totalorder %v181, %v199
    %v201 = vsel %vm200, %v176, 0.0
    %v202 = vsel %vm98, %v201, 0.0
    %203 = vadd.xlane.f32.xlu0 %v202
    %v204 = vpop.xlane.xlu0 %203
    %vm205 = vcmp.ne.s32.totalorder %v179, 4294967196
    %v206 = vsel %vm205, 1, 0
    %v207 = vcvt.s32.f32 %v206
    %v208 = vsub.f32 %v196, %v204
    %v209 = vmul.f32 %v208, %v207
    %vm210 = vcmask 1024
    %v211 = vsel %vm210, %v207, 0.0
    %212 = vadd.xlane.f32.xlu0 %v211
    %v213 = vpop.xlane.xlu0 %212
    %v214 = vrot.slane %v213, 4
    %v215 = vadd.f32 %v213, %v214
    %v216 = vrot.slane %v215, 2
    %v217 = vadd.f32 %v215, %v216
    %v218 = vrot.slane %v217, 1
    %v219 = vadd.f32 %v217, %v218
    %s220 = vtos %v219
    %v221 = vsel %vm210, %v209, 0.0
    %222 = vadd.xlane.f32.xlu0 %v221
    %v223 = vpop.xlane.xlu0 %222
    %v224 = vrot.slane %v223, 4
    %v225 = vadd.f32 %v223, %v224
    %v226 = vrot.slane %v225, 2
    %v227 = vadd.f32 %v225, %v226
    %v228 = vrot.slane %v227, 1
    %v229 = vadd.f32 %v227, %v228
    %s230 = vtos %v229
    %s231 = smax.f32 %s220, 1.0
    %v232 = vstv %s231
    %v233 = vrcp.pop %v232
    %v234 = vmul.f32 %v232, %v233
    %v235 = vsub.f32 1.0, %v234
    %v236 = vmul.f32 %v233, %v235
    %v237 = vadd.f32 %v233, %v236
    %vm238 = vweird.f32 %v232
    %vm239 = vweird.f32 %v233
    %vm240 = vmor %vm238, %vm239
    %v241 = vsel %vm240, %v233, %v237
    %v242 = vand.u32 2147483647, %v232
    %vm243 = vcmp.eq.f32.partialorder %v242, 8.507059e+37
    %v244 = vand.u32 %v232, 2147483648
    %v245 = vor.u32 1.1754944e-38, %v244
    %v246 = vsel %vm243, %v245, %v241
    %s247 = vtos %v246
    %s248 = smul.f32 %s230, %s247
    %s249 = scalar_lea.smem [#allocation11], 0
    %250 = sst [smem:[%s249]] %s248
    // Predicated region
    $region42: #{tpu_custom_call.1} parent=1 // pred_check
      _
    $region43: #{tpu_custom_call.1} parent=1 // pred_check_branch
      %252 = sbr.rel (0) target = $region45
    $region44: #{tpu_custom_call.1} parent=1 // pred_region
      %254 = vsyncadd [#allocation4], 0
      %s256 = sshll.u32 [#allocation10], 4
      %s257 = int_to_ptr.vmem [resolvable:$true] %s256
      %s258 = sshll.u32 %s7, 4
      %s259 = int_to_ptr.hbm [resolvable:$true] %s258
      %261 = dma.vmem_to_hbm [thread:$0]  %s257, 32, %s259, [#allocation4]
    $region45: #{tpu_custom_call.1} parent=1 // pred_fallthru
      _
    // Predicated region
    $region46: #{tpu_custom_call.1} parent=1 // pred_check
      _
    $region47: #{tpu_custom_call.1} parent=1 // pred_check_branch
      %263 = sbr.rel (0) target = $region49
    $region48: #{tpu_custom_call.1} parent=1 // pred_region
      %265 = vsyncadd [#allocation5], 0
      %s267 = sshll.u32 %s8, 4
      %s268 = int_to_ptr.hbm [resolvable:$true] %s267
      %270 = dma.smem_to_hbm [#allocation11], 16, %s268, [#allocation5]
    $region49: #{tpu_custom_call.1} parent=1 // pred_fallthru
      _
    // Predicated region
    $region50: #{tpu_custom_call.1} parent=1 // pred_check
      _
    $region51: #{tpu_custom_call.1} parent=1 // pred_check_branch
      %272 = sbr.rel (0) target = $region53
    $region52: #{tpu_custom_call.1} parent=1 // pred_region
      %274 = dma.done [#allocation4], 32
    $region53: #{tpu_custom_call.1} parent=1 // pred_fallthru
      _
    // Predicated region
    $region54: #{tpu_custom_call.1} parent=1 // pred_check
      _
    $region55: #{tpu_custom_call.1} parent=1 // pred_check_branch
      %276 = sbr.rel (0) target = $region57
    $region56: #{tpu_custom_call.1} parent=1 // pred_region
      %278 = dma.done [#allocation5], 16
    $region57: #{tpu_custom_call.1} parent=1 // pred_fallthru
      _
    %279 = sfence
    %280 = vsyncpa [#allocation3], 1
    %281 = vsyncpa [#allocation9], 1
    %282 = vsyncpa [#allocation4], 1
    %283 = vsyncpa [#allocation5], 1
    %284 = vsyncpa [#allocation6], 1

</llo_original>
